<compile_context>
chip_gen: v7x
topology: tpu7x:2x2x1
jax: 0.10.0
libtpu: 0.0.40
codegen_flags: <defaults>
</compile_context>

<pallas_src>
import functools
import math

import jax
import jax.numpy as jnp
from jax.experimental import pallas as pl
from jax.experimental.pallas import tpu as pltpu


def _round_up(x, m):
    return ((x + m - 1) // m) * m


def _cdiv(a, b):
    return -(-a // b)


# ----------------------------------------------------------------------------
# Kernel
# ----------------------------------------------------------------------------
def _fused_sgns_kernel(u_ref, v_ref, nv_ref, au_ref, av_ref, anv_ref,
                       out_ref, aout_ref, *, eps, n1, n2):
    """Per-sample SGNS losses for primary and aux sets, one batch tile.

    u, v: (D, T); nv: (N, D, T)  -- the batch tile T rides the 128-lane axis,
    D rides sublanes. Inputs may be bf16; all math is f32. Writes (1, T)
    per-sample losses for each set.
    """

    def per_sample_loss(u_r, v_r, nv_r, n, o_r):
        u = u_r[...].astype(jnp.float32)                         # (D, T)
        v = v_r[...].astype(jnp.float32)
        # positive: sum_d u*v -> clamp -> -log   (cross-sublane reduce, XLU)
        pos = jnp.sum(u * v, axis=0, keepdims=True)              # (1, T)
        acc = -jnp.log(jnp.clip(pos, eps, 1.0 - eps))
        # negatives: small static unroll over N; live state per step is just a
        # (D, T) product + (1, T) accumulator -> no (N, D, T) f32 temporary.
        for k in range(n):
            nk = nv_r[k].astype(jnp.float32)                     # (D, T)
            s = jnp.sum(nk * u, axis=0, keepdims=True)           # (1, T)
            s = jnp.clip(s, eps, 1.0 - eps)
            acc = acc - jnp.log(1.0 - s)
        o_r[...] = acc

    per_sample_loss(u_ref, v_ref, nv_ref, n1, out_ref)
    per_sample_loss(au_ref, av_ref, anv_ref, n2, aout_ref)


# ----------------------------------------------------------------------------
# Tiling plan (generation-aware, sublane-padding-aware)
# ----------------------------------------------------------------------------
def _plan_tiles(B1, n1, d1, B2, n2, d2, transfer_bytes):
    try:
        vmem_cap = int(pltpu.get_tpu_info().vmem_capacity_bytes)
    except Exception:
        vmem_cap = 64 * 1024 * 1024          # conservative (v7x per-TC)
    # Scoped limit: leave headroom for f32 temps + compiler scratch.
    vmem_limit = min((vmem_cap * 3) // 4, 96 * 1024 * 1024)
    # Inputs are double-buffered by BlockSpec pipelining -> keep 2x(per-step
    # inputs) at ~half the limit, the rest for f32 temps/outputs.
    in_budget = vmem_limit // 4

    # Per batch-row (lane) bytes per step, including sublane padding:
    # bf16 packs 16 sublanes per vreg, f32 packs 8.
    sub = 8 * max(1, 4 // transfer_bytes)
    r1 = (2 + n1) * _round_up(d1, sub) * transfer_bytes
    r2 = (2 + n2) * _round_up(d2, sub) * transfer_bytes
    r_out = 2 * 8 * 4                         # two (1, blk) f32 outputs pad to 8 sublanes
    per_row = max(1, r1 + r2 + r_out)

    blk = min(in_budget // per_row, 2048)
    blk = max(128, (blk // 128) * 128)

    b_max = max(B1, B2, 1)
    bp = _round_up(b_max, 128)
    # Prefer >=4 grid steps (pipelining + v7x megacore) when the batch is big
    # enough, but never shrink a block below 512 lanes to get there.
    if bp > 4 * 512:
        blk = min(blk, max(512, _round_up(_cdiv(bp, 4), 128)))
    grid = _cdiv(bp, blk)

    # Per-set block widths on the shared grid: a small set is not padded all
    # the way to the larger set's length.
    blk1 = min(blk, _round_up(_cdiv(max(B1, 1), grid), 128))
    blk2 = min(blk, _round_up(_cdiv(max(B2, 1), grid), 128))
    return blk1, grid * blk1, blk2, grid * blk2, grid, int(vmem_limit)


# ----------------------------------------------------------------------------
# pallas_call wrapper
# ----------------------------------------------------------------------------
def fused_sgns_losses(u_T, v_T, nv_T, au_T, av_T, anv_T, *, eps,
                      blk1, blk2, grid, vmem_limit):
    """Returns per-sample losses ((1, P1), (1, P2)) for primary and aux sets."""
    d1, P1 = u_T.shape
    n1 = nv_T.shape[0]
    d2, P2 = au_T.shape
    n2 = anv_T.shape[0]
    assert P1 == grid * blk1 and P2 == grid * blk2

    kernel = functools.partial(_fused_sgns_kernel, eps=float(eps), n1=n1, n2=n2)
    im2 = lambda i: (0, i)
    im3 = lambda i: (0, 0, i)

    return pl.pallas_call(
        kernel,
        out_shape=(jax.ShapeDtypeStruct((1, P1), jnp.float32),
                   jax.ShapeDtypeStruct((1, P2), jnp.float32)),
        grid_spec=pltpu.PrefetchScalarGridSpec(
            num_scalar_prefetch=0,
            grid=(grid,),
            in_specs=[
                pl.BlockSpec((d1, blk1), im2),        # emb_u^T      (D1, P1)
                pl.BlockSpec((d1, blk1), im2),        # emb_v^T      (D1, P1)
                pl.BlockSpec((n1, d1, blk1), im3),    # emb_neg_v^T  (N1, D1, P1)
                pl.BlockSpec((d2, blk2), im2),        # aux_u^T      (D2, P2)
                pl.BlockSpec((d2, blk2), im2),        # aux_v^T      (D2, P2)
                pl.BlockSpec((n2, d2, blk2), im3),    # aux_neg_v^T  (N2, D2, P2)
            ],
            out_specs=(pl.BlockSpec((1, blk1), im2),
                       pl.BlockSpec((1, blk2), im2)),
        ),
        compiler_params=pltpu.CompilerParams(
            dimension_semantics=("parallel",),        # no accumulator -> megacore OK
            vmem_limit_bytes=vmem_limit,
        ),
    )(u_T, v_T, nv_T, au_T, av_T, anv_T)


# ----------------------------------------------------------------------------
# Model
# ----------------------------------------------------------------------------
def _to_lane_major_2d(x, padded_rows, dtype):
    # (B, D) -> (D, P) in transfer dtype: batch on the 128-lane axis.
    x = jnp.pad(x.astype(dtype), ((0, padded_rows - x.shape[0]), (0, 0)))
    return x.T


def _to_lane_major_3d(x, padded_rows, dtype):
    # (B, N, D) -> (N, D, P): D on sublanes, batch on lanes.
    x = jnp.pad(x.astype(dtype), ((0, padded_rows - x.shape[0]), (0, 0), (0, 0)))
    return jnp.transpose(x, (1, 2, 0))


class LogitSGNSModelPallas:
    def __init__(self, vocab_size, aux_vocab_size, emb_dimension,
                 aux_emb_dimension, epsilon, aux_ratio, revgrad=False, seed=0,
                 transfer_dtype=jnp.bfloat16):
        self.vocab_size = vocab_size
        self.aux_vocab_size = aux_vocab_size
        self.emb_dimension = emb_dimension
        self.aux_emb_dimension = aux_emb_dimension
        self.eps = epsilon
        self.aux_ratio = aux_ratio
        self.revgrad = revgrad
        # bf16 halves HBM bytes of this memory-bound kernel; pass jnp.float32
        # for bit-exact parity with the f32 PyTorch module.
        self.transfer_dtype = transfer_dtype

        key = jax.random.PRNGKey(seed)
        k1, k2, k3, k4 = jax.random.split(key, 4)
        initrange = 1.0 / math.sqrt(emb_dimension)
        aux_initrange = 1.0 / math.sqrt(aux_emb_dimension)
        # Standard (vocab, D) layout: gathers are contiguous row reads.
        self.u_embeddings = jax.random.uniform(
            k1, (vocab_size, emb_dimension), jnp.float32, -initrange, initrange)
        self.v_embeddings = jax.random.uniform(
            k2, (vocab_size, emb_dimension), jnp.float32, -initrange, initrange)
        self.aux_u_embeddings = jax.random.uniform(
            k3, (aux_vocab_size, aux_emb_dimension), jnp.float32,
            -aux_initrange, aux_initrange)
        self.aux_v_embeddings = jax.random.uniform(
            k4, (aux_vocab_size, aux_emb_dimension), jnp.float32,
            -aux_initrange, aux_initrange)

    def forward(self, pos_u, pos_v, neg_v, aux_pos_u, aux_pos_v, aux_neg_v):
        B1, N1 = neg_v.shape
        B2, N2 = aux_neg_v.shape
        d1, d2 = self.emb_dimension, self.aux_emb_dimension
        tbytes = jnp.dtype(self.transfer_dtype).itemsize

        blk1, P1, blk2, P2, grid, vmem_limit = _plan_tiles(
            B1, N1, d1, B2, N2, d2, tbytes)

        # Embedding lookups: contiguous row gathers on (vocab, D) tables.
        emb_u = jnp.take(self.u_embeddings, pos_u, axis=0)          # (B1, D1)
        emb_v = jnp.take(self.v_embeddings, pos_v, axis=0)          # (B1, D1)
        emb_neg = jnp.take(self.v_embeddings, neg_v, axis=0)        # (B1, N1, D1)
        aux_u = jnp.take(self.aux_u_embeddings, aux_pos_u, axis=0)  # (B2, D2)
        aux_v = jnp.take(self.aux_v_embeddings, aux_pos_v, axis=0)  # (B2, D2)
        aux_neg = jnp.take(self.aux_v_embeddings, aux_neg_v, axis=0)

        dt = self.transfer_dtype
        u_T = _to_lane_major_2d(emb_u, P1, dt)       # (D1, P1)
        v_T = _to_lane_major_2d(emb_v, P1, dt)       # (D1, P1)
        nv_T = _to_lane_major_3d(emb_neg, P1, dt)    # (N1, D1, P1)
        au_T = _to_lane_major_2d(aux_u, P2, dt)      # (D2, P2)
        av_T = _to_lane_major_2d(aux_v, P2, dt)      # (D2, P2)
        anv_T = _to_lane_major_3d(aux_neg, P2, dt)   # (N2, D2, P2)

        losses, aux_losses = fused_sgns_losses(
            u_T, v_T, nv_T, au_T, av_T, anv_T,
            eps=self.eps, blk1=blk1, blk2=blk2, grid=grid,
            vmem_limit=vmem_limit)

        # Tiny final mean in JAX; padded rows are sliced off before the mean.
        primary_x = jnp.mean(losses[0, :B1])
        aux_x = jnp.mean(aux_losses[0, :B2])
        # TODO(synk): revgrad (grad_reverse) only affects backward; forward unchanged.
        return primary_x, aux_x


# ----------------------------------------------------------------------------
# Self-check
# ----------------------------------------------------------------------------
def _reference_loss(emb_u, emb_v, emb_neg_v, eps):
    score = jnp.sum(emb_u * emb_v, axis=1)
    score = -jnp.log(jnp.clip(score, eps, 1.0 - eps))
    neg = jnp.einsum('bnd,bd->bn', emb_neg_v, emb_u)
    neg = jnp.clip(neg, eps, 1.0 - eps)
    neg = -jnp.sum(jnp.log(1.0 - neg), axis=1)
    return jnp.mean(score + neg)


if __name__ == "__main__":
    # Small deterministic setup.
    vocab_size, aux_vocab_size = 50, 30
    emb_dim, aux_emb_dim = 32, 16
    eps = 1e-4
    B, N, aux_N = 8, 5, 4

    model = LogitSGNSModelPallas(vocab_size, aux_vocab_size, emb_dim,
                                 aux_emb_dim, eps, aux_ratio=0.5,
                                 revgrad=False, seed=0)

    key = jax.random.PRNGKey(0)
    ks = jax.random.split(key, 6)
    pos_u = jax.random.randint(ks[0], (B,), 0, vocab_size)
    pos_v = jax.random.randint(ks[1], (B,), 0, vocab_size)
    neg_v = jax.random.randint(ks[2], (B, N), 0, vocab_size)
    aux_pos_u = jax.random.randint(ks[3], (B,), 0, aux_vocab_size)
    aux_pos_v = jax.random.randint(ks[4], (B,), 0, aux_vocab_size)
    aux_neg_v = jax.random.randint(ks[5], (B, aux_N), 0, aux_vocab_size)

    primary_x, aux_x = model.forward(pos_u, pos_v, neg_v,
                                     aux_pos_u, aux_pos_v, aux_neg_v)
    jax.block_until_ready((primary_x, aux_x))

    # Pure-JAX reference of the same math, with inputs quantized to the same
    # transfer dtype the kernel receives (isolates kernel math from the bf16
    # transfer quantization, which is an intentional perf choice).
    q = lambda x: x.astype(model.transfer_dtype).astype(jnp.float32)
    emb_u = q(jnp.take(model.u_embeddings, pos_u, axis=0))
    emb_v = q(jnp.take(model.v_embeddings, pos_v, axis=0))
    emb_neg_v = q(jnp.take(model.v_embeddings, neg_v, axis=0))
    aux_emb_u = q(jnp.take(model.aux_u_embeddings, aux_pos_u, axis=0))
    aux_emb_v = q(jnp.take(model.aux_v_embeddings, aux_pos_v, axis=0))
    aux_emb_neg_v = q(jnp.take(model.aux_v_embeddings, aux_neg_v, axis=0))
    ref_primary = _reference_loss(emb_u, emb_v, emb_neg_v, eps)
    ref_aux = _reference_loss(aux_emb_u, aux_emb_v, aux_emb_neg_v, eps)

    assert jnp.allclose(primary_x, ref_primary, rtol=2e-3, atol=2e-3), \
        (float(primary_x), float(ref_primary))
    assert jnp.allclose(aux_x, ref_aux, rtol=2e-3, atol=2e-3), \
        (float(aux_x), float(ref_aux))

    print("KERNEL_OK")
</pallas_src>

<mosaic_0001>
module attributes {stable_mosaic.version = 11 : i64} {
  func.func @_fused_sgns_kernel(%arg0: i32, %arg1: memref<32x128xbf16, #tpu.memory_space<vmem>>, %arg2: memref<32x128xbf16, #tpu.memory_space<vmem>>, %arg3: memref<5x32x128xbf16, #tpu.memory_space<vmem>>, %arg4: memref<16x128xbf16, #tpu.memory_space<vmem>>, %arg5: memref<16x128xbf16, #tpu.memory_space<vmem>>, %arg6: memref<4x16x128xbf16, #tpu.memory_space<vmem>>, %arg7: memref<1x128xf32, #tpu.memory_space<vmem>>, %arg8: memref<1x128xf32, #tpu.memory_space<vmem>>) attributes {dimension_semantics = [#tpu.dimension_semantics<parallel>], iteration_bounds = array<i64: 1>, scalar_prefetch = 0 : i64, scratch_operands = 0 : i64, tpu.core_type = #tpu.core_type<tc>, window_params = [{transform_indices = @transform_0, window_bounds = array<i64: 32, 128>}, {transform_indices = @transform_1, window_bounds = array<i64: 32, 128>}, {transform_indices = @transform_2, window_bounds = array<i64: 5, 32, 128>}, {transform_indices = @transform_3, window_bounds = array<i64: 16, 128>}, {transform_indices = @transform_4, window_bounds = array<i64: 16, 128>}, {transform_indices = @transform_5, window_bounds = array<i64: 4, 16, 128>}, {transform_indices = @transform_6, window_bounds = array<i64: 1, 128>}, {transform_indices = @transform_7, window_bounds = array<i64: 1, 128>}]} {
    %c0 = arith.constant 0 : index
    %c0_0 = arith.constant 0 : index
    %0 = vector.load %arg1[%c0, %c0_0] : memref<32x128xbf16, #tpu.memory_space<vmem>>, vector<32x128xbf16>
    %1 = arith.extf %0 : vector<32x128xbf16> to vector<32x128xf32>
    %c0_1 = arith.constant 0 : index
    %c0_2 = arith.constant 0 : index
    %2 = vector.load %arg2[%c0_1, %c0_2] : memref<32x128xbf16, #tpu.memory_space<vmem>>, vector<32x128xbf16>
    %3 = arith.extf %2 : vector<32x128xbf16> to vector<32x128xf32>
    %4 = arith.mulf %1, %3 : vector<32x128xf32>
    %cst = arith.constant dense<0.000000e+00> : vector<128xf32>
    %5 = vector.multi_reduction <add>, %4, %cst [0] : vector<32x128xf32> to vector<128xf32>
    %6 = vector.shape_cast %5 : vector<128xf32> to vector<1x128xf32>
    %cst_3 = arith.constant 9.99999974E-5 : f32
    %cst_4 = arith.constant 0.999899983 : f32
    %7 = vector.broadcast %cst_3 : f32 to vector<1x128xf32>
    %8 = arith.maximumf %7, %6 : vector<1x128xf32>
    %9 = vector.broadcast %cst_4 : f32 to vector<1x128xf32>
    %10 = arith.minimumf %9, %8 : vector<1x128xf32>
    %11 = math.log %10 : vector<1x128xf32>
    %cst_5 = arith.constant 0.000000e+00 : f32
    %12 = vector.broadcast %cst_5 : f32 to vector<1x128xf32>
    %13 = arith.subf %12, %11 : vector<1x128xf32>
    %c0_6 = arith.constant 0 : index
    %c0_7 = arith.constant 0 : index
    %c0_8 = arith.constant 0 : index
    %14 = vector.load %arg3[%c0_6, %c0_7, %c0_8] : memref<5x32x128xbf16, #tpu.memory_space<vmem>>, vector<1x32x128xbf16>
    %15 = vector.shape_cast %14 : vector<1x32x128xbf16> to vector<32x128xbf16>
    %16 = arith.extf %15 : vector<32x128xbf16> to vector<32x128xf32>
    %17 = arith.mulf %16, %1 : vector<32x128xf32>
    %cst_9 = arith.constant dense<0.000000e+00> : vector<128xf32>
    %18 = vector.multi_reduction <add>, %17, %cst_9 [0] : vector<32x128xf32> to vector<128xf32>
    %19 = vector.shape_cast %18 : vector<128xf32> to vector<1x128xf32>
    %cst_10 = arith.constant 9.99999974E-5 : f32
    %cst_11 = arith.constant 0.999899983 : f32
    %20 = vector.broadcast %cst_10 : f32 to vector<1x128xf32>
    %21 = arith.maximumf %20, %19 : vector<1x128xf32>
    %22 = vector.broadcast %cst_11 : f32 to vector<1x128xf32>
    %23 = arith.minimumf %22, %21 : vector<1x128xf32>
    %cst_12 = arith.constant 1.000000e+00 : f32
    %24 = vector.broadcast %cst_12 : f32 to vector<1x128xf32>
    %25 = arith.subf %24, %23 : vector<1x128xf32>
    %26 = math.log %25 : vector<1x128xf32>
    %27 = arith.subf %13, %26 : vector<1x128xf32>
    %c1 = arith.constant 1 : index
    %c0_13 = arith.constant 0 : index
    %c0_14 = arith.constant 0 : index
    %28 = vector.load %arg3[%c1, %c0_13, %c0_14] : memref<5x32x128xbf16, #tpu.memory_space<vmem>>, vector<1x32x128xbf16>
    %29 = vector.shape_cast %28 : vector<1x32x128xbf16> to vector<32x128xbf16>
    %30 = arith.extf %29 : vector<32x128xbf16> to vector<32x128xf32>
    %31 = arith.mulf %30, %1 : vector<32x128xf32>
    %cst_15 = arith.constant dense<0.000000e+00> : vector<128xf32>
    %32 = vector.multi_reduction <add>, %31, %cst_15 [0] : vector<32x128xf32> to vector<128xf32>
    %33 = vector.shape_cast %32 : vector<128xf32> to vector<1x128xf32>
    %cst_16 = arith.constant 9.99999974E-5 : f32
    %cst_17 = arith.constant 0.999899983 : f32
    %34 = vector.broadcast %cst_16 : f32 to vector<1x128xf32>
    %35 = arith.maximumf %34, %33 : vector<1x128xf32>
    %36 = vector.broadcast %cst_17 : f32 to vector<1x128xf32>
    %37 = arith.minimumf %36, %35 : vector<1x128xf32>
    %cst_18 = arith.constant 1.000000e+00 : f32
    %38 = vector.broadcast %cst_18 : f32 to vector<1x128xf32>
    %39 = arith.subf %38, %37 : vector<1x128xf32>
    %40 = math.log %39 : vector<1x128xf32>
    %41 = arith.subf %27, %40 : vector<1x128xf32>
    %c2 = arith.constant 2 : index
    %c0_19 = arith.constant 0 : index
    %c0_20 = arith.constant 0 : index
    %42 = vector.load %arg3[%c2, %c0_19, %c0_20] : memref<5x32x128xbf16, #tpu.memory_space<vmem>>, vector<1x32x128xbf16>
    %43 = vector.shape_cast %42 : vector<1x32x128xbf16> to vector<32x128xbf16>
    %44 = arith.extf %43 : vector<32x128xbf16> to vector<32x128xf32>
    %45 = arith.mulf %44, %1 : vector<32x128xf32>
    %cst_21 = arith.constant dense<0.000000e+00> : vector<128xf32>
    %46 = vector.multi_reduction <add>, %45, %cst_21 [0] : vector<32x128xf32> to vector<128xf32>
    %47 = vector.shape_cast %46 : vector<128xf32> to vector<1x128xf32>
    %cst_22 = arith.constant 9.99999974E-5 : f32
    %cst_23 = arith.constant 0.999899983 : f32
    %48 = vector.broadcast %cst_22 : f32 to vector<1x128xf32>
    %49 = arith.maximumf %48, %47 : vector<1x128xf32>
    %50 = vector.broadcast %cst_23 : f32 to vector<1x128xf32>
    %51 = arith.minimumf %50, %49 : vector<1x128xf32>
    %cst_24 = arith.constant 1.000000e+00 : f32
    %52 = vector.broadcast %cst_24 : f32 to vector<1x128xf32>
    %53 = arith.subf %52, %51 : vector<1x128xf32>
    %54 = math.log %53 : vector<1x128xf32>
    %55 = arith.subf %41, %54 : vector<1x128xf32>
    %c3 = arith.constant 3 : index
    %c0_25 = arith.constant 0 : index
    %c0_26 = arith.constant 0 : index
    %56 = vector.load %arg3[%c3, %c0_25, %c0_26] : memref<5x32x128xbf16, #tpu.memory_space<vmem>>, vector<1x32x128xbf16>
    %57 = vector.shape_cast %56 : vector<1x32x128xbf16> to vector<32x128xbf16>
    %58 = arith.extf %57 : vector<32x128xbf16> to vector<32x128xf32>
    %59 = arith.mulf %58, %1 : vector<32x128xf32>
    %cst_27 = arith.constant dense<0.000000e+00> : vector<128xf32>
    %60 = vector.multi_reduction <add>, %59, %cst_27 [0] : vector<32x128xf32> to vector<128xf32>
    %61 = vector.shape_cast %60 : vector<128xf32> to vector<1x128xf32>
    %cst_28 = arith.constant 9.99999974E-5 : f32
    %cst_29 = arith.constant 0.999899983 : f32
    %62 = vector.broadcast %cst_28 : f32 to vector<1x128xf32>
    %63 = arith.maximumf %62, %61 : vector<1x128xf32>
    %64 = vector.broadcast %cst_29 : f32 to vector<1x128xf32>
    %65 = arith.minimumf %64, %63 : vector<1x128xf32>
    %cst_30 = arith.constant 1.000000e+00 : f32
    %66 = vector.broadcast %cst_30 : f32 to vector<1x128xf32>
    %67 = arith.subf %66, %65 : vector<1x128xf32>
    %68 = math.log %67 : vector<1x128xf32>
    %69 = arith.subf %55, %68 : vector<1x128xf32>
    %c4 = arith.constant 4 : index
    %c0_31 = arith.constant 0 : index
    %c0_32 = arith.constant 0 : index
    %70 = vector.load %arg3[%c4, %c0_31, %c0_32] : memref<5x32x128xbf16, #tpu.memory_space<vmem>>, vector<1x32x128xbf16>
    %71 = vector.shape_cast %70 : vector<1x32x128xbf16> to vector<32x128xbf16>
    %72 = arith.extf %71 : vector<32x128xbf16> to vector<32x128xf32>
    %73 = arith.mulf %72, %1 : vector<32x128xf32>
    %cst_33 = arith.constant dense<0.000000e+00> : vector<128xf32>
    %74 = vector.multi_reduction <add>, %73, %cst_33 [0] : vector<32x128xf32> to vector<128xf32>
    %75 = vector.shape_cast %74 : vector<128xf32> to vector<1x128xf32>
    %cst_34 = arith.constant 9.99999974E-5 : f32
    %cst_35 = arith.constant 0.999899983 : f32
    %76 = vector.broadcast %cst_34 : f32 to vector<1x128xf32>
    %77 = arith.maximumf %76, %75 : vector<1x128xf32>
    %78 = vector.broadcast %cst_35 : f32 to vector<1x128xf32>
    %79 = arith.minimumf %78, %77 : vector<1x128xf32>
    %cst_36 = arith.constant 1.000000e+00 : f32
    %80 = vector.broadcast %cst_36 : f32 to vector<1x128xf32>
    %81 = arith.subf %80, %79 : vector<1x128xf32>
    %82 = math.log %81 : vector<1x128xf32>
    %83 = arith.subf %69, %82 : vector<1x128xf32>
    %c0_37 = arith.constant 0 : index
    %c0_38 = arith.constant 0 : index
    %84 = vector.load %arg7[%c0_37, %c0_38] : memref<1x128xf32, #tpu.memory_space<vmem>>, vector<1x128xf32>
    tpu.vector_store %arg7[%c0_37, %c0_38], %83 {strides = array<i32>} : memref<1x128xf32, #tpu.memory_space<vmem>>, vector<1x128xf32>,
    %c0_39 = arith.constant 0 : index
    %c0_40 = arith.constant 0 : index
    %85 = vector.load %arg4[%c0_39, %c0_40] : memref<16x128xbf16, #tpu.memory_space<vmem>>, vector<16x128xbf16>
    %86 = arith.extf %85 : vector<16x128xbf16> to vector<16x128xf32>
    %c0_41 = arith.constant 0 : index
    %c0_42 = arith.constant 0 : index
    %87 = vector.load %arg5[%c0_41, %c0_42] : memref<16x128xbf16, #tpu.memory_space<vmem>>, vector<16x128xbf16>
    %88 = arith.extf %87 : vector<16x128xbf16> to vector<16x128xf32>
    %89 = arith.mulf %86, %88 : vector<16x128xf32>
    %cst_43 = arith.constant dense<0.000000e+00> : vector<128xf32>
    %90 = vector.multi_reduction <add>, %89, %cst_43 [0] : vector<16x128xf32> to vector<128xf32>
    %91 = vector.shape_cast %90 : vector<128xf32> to vector<1x128xf32>
    %cst_44 = arith.constant 9.99999974E-5 : f32
    %cst_45 = arith.constant 0.999899983 : f32
    %92 = vector.broadcast %cst_44 : f32 to vector<1x128xf32>
    %93 = arith.maximumf %92, %91 : vector<1x128xf32>
    %94 = vector.broadcast %cst_45 : f32 to vector<1x128xf32>
    %95 = arith.minimumf %94, %93 : vector<1x128xf32>
    %96 = math.log %95 : vector<1x128xf32>
    %cst_46 = arith.constant 0.000000e+00 : f32
    %97 = vector.broadcast %cst_46 : f32 to vector<1x128xf32>
    %98 = arith.subf %97, %96 : vector<1x128xf32>
    %c0_47 = arith.constant 0 : index
    %c0_48 = arith.constant 0 : index
    %c0_49 = arith.constant 0 : index
    %99 = vector.load %arg6[%c0_47, %c0_48, %c0_49] : memref<4x16x128xbf16, #tpu.memory_space<vmem>>, vector<1x16x128xbf16>
    %100 = vector.shape_cast %99 : vector<1x16x128xbf16> to vector<16x128xbf16>
    %101 = arith.extf %100 : vector<16x128xbf16> to vector<16x128xf32>
    %102 = arith.mulf %101, %86 : vector<16x128xf32>
    %cst_50 = arith.constant dense<0.000000e+00> : vector<128xf32>
    %103 = vector.multi_reduction <add>, %102, %cst_50 [0] : vector<16x128xf32> to vector<128xf32>
    %104 = vector.shape_cast %103 : vector<128xf32> to vector<1x128xf32>
    %cst_51 = arith.constant 9.99999974E-5 : f32
    %cst_52 = arith.constant 0.999899983 : f32
    %105 = vector.broadcast %cst_51 : f32 to vector<1x128xf32>
    %106 = arith.maximumf %105, %104 : vector<1x128xf32>
    %107 = vector.broadcast %cst_52 : f32 to vector<1x128xf32>
    %108 = arith.minimumf %107, %106 : vector<1x128xf32>
    %cst_53 = arith.constant 1.000000e+00 : f32
    %109 = vector.broadcast %cst_53 : f32 to vector<1x128xf32>
    %110 = arith.subf %109, %108 : vector<1x128xf32>
    %111 = math.log %110 : vector<1x128xf32>
    %112 = arith.subf %98, %111 : vector<1x128xf32>
    %c1_54 = arith.constant 1 : index
    %c0_55 = arith.constant 0 : index
    %c0_56 = arith.constant 0 : index
    %113 = vector.load %arg6[%c1_54, %c0_55, %c0_56] : memref<4x16x128xbf16, #tpu.memory_space<vmem>>, vector<1x16x128xbf16>
    %114 = vector.shape_cast %113 : vector<1x16x128xbf16> to vector<16x128xbf16>
    %115 = arith.extf %114 : vector<16x128xbf16> to vector<16x128xf32>
    %116 = arith.mulf %115, %86 : vector<16x128xf32>
    %cst_57 = arith.constant dense<0.000000e+00> : vector<128xf32>
    %117 = vector.multi_reduction <add>, %116, %cst_57 [0] : vector<16x128xf32> to vector<128xf32>
    %118 = vector.shape_cast %117 : vector<128xf32> to vector<1x128xf32>
    %cst_58 = arith.constant 9.99999974E-5 : f32
    %cst_59 = arith.constant 0.999899983 : f32
    %119 = vector.broadcast %cst_58 : f32 to vector<1x128xf32>
    %120 = arith.maximumf %119, %118 : vector<1x128xf32>
    %121 = vector.broadcast %cst_59 : f32 to vector<1x128xf32>
    %122 = arith.minimumf %121, %120 : vector<1x128xf32>
    %cst_60 = arith.constant 1.000000e+00 : f32
    %123 = vector.broadcast %cst_60 : f32 to vector<1x128xf32>
    %124 = arith.subf %123, %122 : vector<1x128xf32>
    %125 = math.log %124 : vector<1x128xf32>
    %126 = arith.subf %112, %125 : vector<1x128xf32>
    %c2_61 = arith.constant 2 : index
    %c0_62 = arith.constant 0 : index
    %c0_63 = arith.constant 0 : index
    %127 = vector.load %arg6[%c2_61, %c0_62, %c0_63] : memref<4x16x128xbf16, #tpu.memory_space<vmem>>, vector<1x16x128xbf16>
    %128 = vector.shape_cast %127 : vector<1x16x128xbf16> to vector<16x128xbf16>
    %129 = arith.extf %128 : vector<16x128xbf16> to vector<16x128xf32>
    %130 = arith.mulf %129, %86 : vector<16x128xf32>
    %cst_64 = arith.constant dense<0.000000e+00> : vector<128xf32>
    %131 = vector.multi_reduction <add>, %130, %cst_64 [0] : vector<16x128xf32> to vector<128xf32>
    %132 = vector.shape_cast %131 : vector<128xf32> to vector<1x128xf32>
    %cst_65 = arith.constant 9.99999974E-5 : f32
    %cst_66 = arith.constant 0.999899983 : f32
    %133 = vector.broadcast %cst_65 : f32 to vector<1x128xf32>
    %134 = arith.maximumf %133, %132 : vector<1x128xf32>
    %135 = vector.broadcast %cst_66 : f32 to vector<1x128xf32>
    %136 = arith.minimumf %135, %134 : vector<1x128xf32>
    %cst_67 = arith.constant 1.000000e+00 : f32
    %137 = vector.broadcast %cst_67 : f32 to vector<1x128xf32>
    %138 = arith.subf %137, %136 : vector<1x128xf32>
    %139 = math.log %138 : vector<1x128xf32>
    %140 = arith.subf %126, %139 : vector<1x128xf32>
    %c3_68 = arith.constant 3 : index
    %c0_69 = arith.constant 0 : index
    %c0_70 = arith.constant 0 : index
    %141 = vector.load %arg6[%c3_68, %c0_69, %c0_70] : memref<4x16x128xbf16, #tpu.memory_space<vmem>>, vector<1x16x128xbf16>
    %142 = vector.shape_cast %141 : vector<1x16x128xbf16> to vector<16x128xbf16>
    %143 = arith.extf %142 : vector<16x128xbf16> to vector<16x128xf32>
    %144 = arith.mulf %143, %86 : vector<16x128xf32>
    %cst_71 = arith.constant dense<0.000000e+00> : vector<128xf32>
    %145 = vector.multi_reduction <add>, %144, %cst_71 [0] : vector<16x128xf32> to vector<128xf32>
    %146 = vector.shape_cast %145 : vector<128xf32> to vector<1x128xf32>
    %cst_72 = arith.constant 9.99999974E-5 : f32
    %cst_73 = arith.constant 0.999899983 : f32
    %147 = vector.broadcast %cst_72 : f32 to vector<1x128xf32>
    %148 = arith.maximumf %147, %146 : vector<1x128xf32>
    %149 = vector.broadcast %cst_73 : f32 to vector<1x128xf32>
    %150 = arith.minimumf %149, %148 : vector<1x128xf32>
    %cst_74 = arith.constant 1.000000e+00 : f32
    %151 = vector.broadcast %cst_74 : f32 to vector<1x128xf32>
    %152 = arith.subf %151, %150 : vector<1x128xf32>
    %153 = math.log %152 : vector<1x128xf32>
    %154 = arith.subf %140, %153 : vector<1x128xf32>
    %c0_75 = arith.constant 0 : index
    %c0_76 = arith.constant 0 : index
    %155 = vector.load %arg8[%c0_75, %c0_76] : memref<1x128xf32, #tpu.memory_space<vmem>>, vector<1x128xf32>
    tpu.vector_store %arg8[%c0_75, %c0_76], %154 {strides = array<i32>} : memref<1x128xf32, #tpu.memory_space<vmem>>, vector<1x128xf32>,
    return
  }
  func.func @transform_0(%arg0: i32) -> (i32, i32) {
    %c0_i32 = arith.constant 0 : i32
    %c0_i32_0 = arith.constant 0 : i32
    return %c0_i32, %arg0 : i32, i32
  }
  func.func @transform_1(%arg0: i32) -> (i32, i32) {
    %c0_i32 = arith.constant 0 : i32
    %c0_i32_0 = arith.constant 0 : i32
    return %c0_i32, %arg0 : i32, i32
  }
  func.func @transform_2(%arg0: i32) -> (i32, i32, i32) {
    %c0_i32 = arith.constant 0 : i32
    %c0_i32_0 = arith.constant 0 : i32
    %c0_i32_1 = arith.constant 0 : i32
    return %c0_i32, %c0_i32_0, %arg0 : i32, i32, i32
  }
  func.func @transform_3(%arg0: i32) -> (i32, i32) {
    %c0_i32 = arith.constant 0 : i32
    %c0_i32_0 = arith.constant 0 : i32
    return %c0_i32, %arg0 : i32, i32
  }
  func.func @transform_4(%arg0: i32) -> (i32, i32) {
    %c0_i32 = arith.constant 0 : i32
    %c0_i32_0 = arith.constant 0 : i32
    return %c0_i32, %arg0 : i32, i32
  }
  func.func @transform_5(%arg0: i32) -> (i32, i32, i32) {
    %c0_i32 = arith.constant 0 : i32
    %c0_i32_0 = arith.constant 0 : i32
    %c0_i32_1 = arith.constant 0 : i32
    return %c0_i32, %c0_i32_0, %arg0 : i32, i32, i32
  }
  func.func @transform_6(%arg0: i32) -> (i32, i32) {
    %c0_i32 = arith.constant 0 : i32
    %c0_i32_0 = arith.constant 0 : i32
    return %c0_i32, %arg0 : i32, i32
  }
  func.func @transform_7(%arg0: i32) -> (i32, i32) {
    %c0_i32 = arith.constant 0 : i32
    %c0_i32_0 = arith.constant 0 : i32
    return %c0_i32, %arg0 : i32, i32
  }
}

</mosaic_0001>

<llo_original>
// kernel: tpu_custom_call.1
$region0: #{tpu_custom_call.1}
  #allocation0 [shape = 'u32[]', space=smem, size = 0x4, offset = 0x4, fixed_abs, tag = 'smem constant byte address 0x4 - core index']
  #allocation1 [shape = 'u32[144,128]{1,0:T(1,128)}', space=vmem, size = 0x12000, scoped, tag = 'internal scratch']
  %s0 = inlined_call_operand.hbm [shape: bf16[32,128], index: 0, kind: input, shape index: {}]
  %s1 = inlined_call_operand.hbm [shape: bf16[32,128], index: 1, kind: input, shape index: {}]
  %s2 = inlined_call_operand.hbm [shape: bf16[5,32,128], index: 2, kind: input, shape index: {}]
  %s3 = inlined_call_operand.vmem [shape: bf16[16,128], index: 3, kind: input, shape index: {}]
  %s4 = inlined_call_operand.hbm [shape: bf16[16,128], index: 4, kind: input, shape index: {}]
  %s5 = inlined_call_operand.hbm [shape: bf16[4,16,128], index: 5, kind: input, shape index: {}]
  %s6 = inlined_call_operand.hbm [shape: f32[1,128], index: 6, kind: output, shape index: {0}]
  %s7 = inlined_call_operand.hbm [shape: f32[1,128], index: 7, kind: output, shape index: {1}]
  %8 = xla_tuple %s6, %s7
  %s9 = sld [smem:[#allocation0]]
  $region62: #{tpu_custom_call.1} parent=0
    _
  %s11 = ssub.s32 1, %s9
  %s12 = scalar_select 0, %s11, %s9
  $region1: #{tpu_custom_call.1} parent=0
    #allocation2 [shape = 'u8[8192]{0}', space=vmem, size = 0x2000, scoped, tag = 'input window, operand 0, single buffered']
    #allocation3 [shape = 's32[1]{0}', space=sflag, size = 0x4, scoped, tag = 'scoped memory for tpu_custom_call.1']
    #allocation4 [shape = 's32[1]{0}', space=sflag, size = 0x4, scoped, tag = 'scoped memory for tpu_custom_call.1']
    #allocation5 [shape = 'u8[8192]{0}', space=vmem, size = 0x2000, scoped, tag = 'input window, operand 1, single buffered']
    #allocation6 [shape = 's32[1]{0}', space=sflag, size = 0x4, scoped, tag = 'scoped memory for tpu_custom_call.1']
    #allocation7 [shape = 'u8[40960]{0}', space=vmem, size = 0xa000, scoped, tag = 'input window, operand 2, single buffered']
    #allocation8 [shape = 'u8[4096]{0}', space=vmem, size = 0x1000, scoped, tag = 'input window, operand 4, single buffered']
    #allocation9 [shape = 's32[1]{0}', space=sflag, size = 0x4, scoped, tag = 'scoped memory for tpu_custom_call.1']
    #allocation10 [shape = 'u8[16384]{0}', space=vmem, size = 0x4000, scoped, tag = 'input window, operand 5, single buffered']
    #allocation11 [shape = 'u8[512]{0}', space=vmem, size = 0x400, scoped, tag = 'output window, operand 0, single buffered']
    #allocation12 [shape = 'u8[512]{0}', space=vmem, size = 0x400, scoped, tag = 'output window, operand 1, single buffered']
    #allocation13 [shape = 's32[1]{0}', space=sflag, size = 0x4, scoped, tag = 'scoped memory for tpu_custom_call.1']
    %13 = vsyncpa [#allocation3], 0
    %14 = vsyncpa [#allocation6], 0
    %15 = vsyncpa [#allocation9], 0
    %16 = vsyncpa [#allocation4], 0
    %17 = vsyncpa [#allocation13], 0
    // Predicated region
    $region2: #{tpu_custom_call.1} parent=1 // pred_check
      _
    $region3: #{tpu_custom_call.1} parent=1 // pred_check_branch
      %19 = sbr.rel (0) target = $region5
    $region4: #{tpu_custom_call.1} parent=1 // pred_region
      %s21 = ssub.s32 256, 256
      %22 = vsyncadd [#allocation3], %s21
      %s23 = sshll.u32 [#allocation2], 4
      %s24 = int_to_ptr.vmem [resolvable:$true] %s23
      %29 = dma.hbm_to_vmem [thread:$0]  %s0, 256, %s24, [#allocation3], 64, 64, 4
    $region5: #{tpu_custom_call.1} parent=1 // pred_fallthru
      _
    // Predicated region
    $region6: #{tpu_custom_call.1} parent=1 // pred_check
      _
    $region7: #{tpu_custom_call.1} parent=1 // pred_check_branch
      %31 = sbr.rel (0) target = $region9
    $region8: #{tpu_custom_call.1} parent=1 // pred_region
      %s33 = ssub.s32 256, 256
      %34 = vsyncadd [#allocation6], %s33
      %s35 = sshll.u32 [#allocation5], 4
      %s36 = int_to_ptr.vmem [resolvable:$true] %s35
      %41 = dma.hbm_to_vmem [thread:$0]  %s1, 256, %s36, [#allocation6], 64, 64, 4
    $region9: #{tpu_custom_call.1} parent=1 // pred_fallthru
      _
    // Predicated region
    $region10: #{tpu_custom_call.1} parent=1 // pred_check
      _
    $region11: #{tpu_custom_call.1} parent=1 // pred_check_branch
      %43 = sbr.rel (0) target = $region13
    $region12: #{tpu_custom_call.1} parent=1 // pred_region
      %s45 = ssub.s32 1280, 1280
      %46 = vsyncadd [#allocation6], %s45
      %s47 = sshll.u32 [#allocation7], 4
      %s48 = int_to_ptr.vmem [resolvable:$true] %s47
      %53 = dma.hbm_to_vmem [thread:$0]  %s2, 1280, %s48, [#allocation6], 64, 64, 4
    $region13: #{tpu_custom_call.1} parent=1 // pred_fallthru
      _
    // Predicated region
    $region14: #{tpu_custom_call.1} parent=1 // pred_check
      _
    $region15: #{tpu_custom_call.1} parent=1 // pred_check_branch
      %55 = sbr.rel (0) target = $region17
    $region16: #{tpu_custom_call.1} parent=1 // pred_region
      _
    $region17: #{tpu_custom_call.1} parent=1 // pred_fallthru
      _
    // Predicated region
    $region18: #{tpu_custom_call.1} parent=1 // pred_check
      _
    $region19: #{tpu_custom_call.1} parent=1 // pred_check_branch
      %57 = sbr.rel (0) target = $region21
    $region20: #{tpu_custom_call.1} parent=1 // pred_region
      %s59 = ssub.s32 128, 128
      %60 = vsyncadd [#allocation9], %s59
      %s61 = sshll.u32 [#allocation8], 4
      %s62 = int_to_ptr.vmem [resolvable:$true] %s61
      %67 = dma.hbm_to_vmem [thread:$0]  %s4, 128, %s62, [#allocation9], 64, 64, 4
    $region21: #{tpu_custom_call.1} parent=1 // pred_fallthru
      _
    // Predicated region
    $region22: #{tpu_custom_call.1} parent=1 // pred_check
      _
    $region23: #{tpu_custom_call.1} parent=1 // pred_check_branch
      %69 = sbr.rel (0) target = $region25
    $region24: #{tpu_custom_call.1} parent=1 // pred_region
      %s71 = ssub.s32 512, 512
      %72 = vsyncadd [#allocation9], %s71
      %s73 = sshll.u32 [#allocation10], 4
      %s74 = int_to_ptr.vmem [resolvable:$true] %s73
      %79 = dma.hbm_to_vmem [thread:$0]  %s5, 512, %s74, [#allocation9], 64, 64, 4
    $region25: #{tpu_custom_call.1} parent=1 // pred_fallthru
      _
    // Predicated region
    $region26: #{tpu_custom_call.1} parent=1 // pred_check
      _
    $region27: #{tpu_custom_call.1} parent=1 // pred_check_branch
      %81 = sbr.rel (0) target = $region29
    $region28: #{tpu_custom_call.1} parent=1 // pred_region
      %82 = dma.done [#allocation3], 256
    $region29: #{tpu_custom_call.1} parent=1 // pred_fallthru
      _
    // Predicated region
    $region30: #{tpu_custom_call.1} parent=1 // pred_check
      _
    $region31: #{tpu_custom_call.1} parent=1 // pred_check_branch
      %84 = sbr.rel (0) target = $region33
    $region32: #{tpu_custom_call.1} parent=1 // pred_region
      %85 = dma.done [#allocation6], 256
    $region33: #{tpu_custom_call.1} parent=1 // pred_fallthru
      _
    // Predicated region
    $region34: #{tpu_custom_call.1} parent=1 // pred_check
      _
    $region35: #{tpu_custom_call.1} parent=1 // pred_check_branch
      %87 = sbr.rel (0) target = $region37
    $region36: #{tpu_custom_call.1} parent=1 // pred_region
      %88 = dma.done [#allocation6], 1280
    $region37: #{tpu_custom_call.1} parent=1 // pred_fallthru
      _
    // Predicated region
    $region38: #{tpu_custom_call.1} parent=1 // pred_check
      _
    $region39: #{tpu_custom_call.1} parent=1 // pred_check_branch
      %90 = sbr.rel (0) target = $region41
    $region40: #{tpu_custom_call.1} parent=1 // pred_region
      %91 = dma.done [#allocation9], 128
    $region41: #{tpu_custom_call.1} parent=1 // pred_fallthru
      _
    // Predicated region
    $region42: #{tpu_custom_call.1} parent=1 // pred_check
      _
    $region43: #{tpu_custom_call.1} parent=1 // pred_check_branch
      %93 = sbr.rel (0) target = $region45
    $region44: #{tpu_custom_call.1} parent=1 // pred_region
      %94 = dma.done [#allocation9], 512
    $region45: #{tpu_custom_call.1} parent=1 // pred_fallthru
      _
    %v95 = vld [vmem:[#allocation2] sm:$0xf]
    %v96 = vld [vmem:[#allocation2 + $0x4] sm:$0xf]
    %v97 = vld [vmem:[#allocation2 + $0x8] sm:$0xf]
    %v98 = vld [vmem:[#allocation2 + $0xc] sm:$0xf]
    %v99 = vunpack.c.l.bf16 %v95
    %v100 = vunpack.c.l.bf16 %v96
    %v101 = vunpack.c.l.bf16 %v97
    %v102 = vunpack.c.l.bf16 %v98
    %v103 = vld [vmem:[#allocation5] sm:$0xf]
    %v104 = vld [vmem:[#allocation5 + $0x4] sm:$0xf]
    %v105 = vld [vmem:[#allocation5 + $0x8] sm:$0xf]
    %v106 = vld [vmem:[#allocation5 + $0xc] sm:$0xf]
    %v107 = vunpack.c.l.bf16 %v103
    %v108 = vunpack.c.l.bf16 %v104
    %v109 = vunpack.c.l.bf16 %v105
    %v110 = vunpack.c.l.bf16 %v106
    %v111 = vmul.f32 %v99, %v107
    %v112 = vmul.f32 %v100, %v108
    %v113 = vmul.f32 %v101, %v109
    %v114 = vmul.f32 %v102, %v110
    %v115 = vadd.f32 %v111, %v112
    %v116 = vadd.f32 %v115, %v113
    %v117 = vadd.f32 %v116, %v114
    %v118 = vrot.slane %v117, 4
    %v119 = vadd.f32 %v117, %v118
    %v120 = vrot.slane %v119, 2
    %v121 = vadd.f32 %v119, %v120
    %v122 = vrot.slane %v121, 1
    %v123 = vadd.f32 %v121, %v122
    %v124 = vmax.f32 %v123, 0.0001
    %v125 = vmin.f32 %v124, 0.9999
    %v126 = vlog2.pop %v125
    %v127 = vmul.f32 %v126, 0.6931472
    %v128 = vsub.f32 0.0, %v127
    %v129 = vld [vmem:[#allocation7] sm:$0xf]
    %v130 = vld [vmem:[#allocation7 + $0x4] sm:$0xf]
    %v131 = vld [vmem:[#allocation7 + $0x8] sm:$0xf]
    %v132 = vld [vmem:[#allocation7 + $0xc] sm:$0xf]
    %v133 = vunpack.c.l.bf16 %v129
    %v134 = vunpack.c.l.bf16 %v130
    %v135 = vunpack.c.l.bf16 %v131
    %v136 = vunpack.c.l.bf16 %v132
    %v137 = vmul.f32 %v133, %v99
    %v138 = vmul.f32 %v134, %v100
    %v139 = vmul.f32 %v135, %v101
    %v140 = vmul.f32 %v136, %v102
    %v141 = vadd.f32 %v137, %v138
    %v142 = vadd.f32 %v141, %v139
    %v143 = vadd.f32 %v142, %v140
    %v144 = vrot.slane %v143, 4
    %v145 = vadd.f32 %v143, %v144
    %v146 = vrot.slane %v145, 2
    %v147 = vadd.f32 %v145, %v146
    %v148 = vrot.slane %v147, 1
    %v149 = vadd.f32 %v147, %v148
    %v150 = vmax.f32 %v149, 0.0001
    %v151 = vmin.f32 %v150, 0.9999
    %v152 = vsub.f32 1.0, %v151
    %v153 = vlog2.pop %v152
    %v154 = vmul.f32 %v153, 0.6931472
    %v155 = vsub.f32 %v128, %v154
    %s156 = scalar_lea.vmem [#allocation7], 16
    %v157 = vld [vmem:[%s156] sm:$0xf]
    %v158 = vld [vmem:[%s156 + $0x4] sm:$0xf]
    %v159 = vld [vmem:[%s156 + $0x8] sm:$0xf]
    %v160 = vld [vmem:[%s156 + $0xc] sm:$0xf]
    %v161 = vunpack.c.l.bf16 %v157
    %v162 = vunpack.c.l.bf16 %v158
    %v163 = vunpack.c.l.bf16 %v159
    %v164 = vunpack.c.l.bf16 %v160
    %v165 = vmul.f32 %v161, %v99
    %v166 = vmul.f32 %v162, %v100
    %v167 = vmul.f32 %v163, %v101
    %v168 = vmul.f32 %v164, %v102
    %v169 = vadd.f32 %v165, %v166
    %v170 = vadd.f32 %v169, %v167
    %v171 = vadd.f32 %v170, %v168
    %v172 = vrot.slane %v171, 4
    %v173 = vadd.f32 %v171, %v172
    %v174 = vrot.slane %v173, 2
    %v175 = vadd.f32 %v173, %v174
    %v176 = vrot.slane %v175, 1
    %v177 = vadd.f32 %v175, %v176
    %v178 = vmax.f32 %v177, 0.0001
    %v179 = vmin.f32 %v178, 0.9999
    %v180 = vsub.f32 1.0, %v179
    %v181 = vlog2.pop %v180
    %v182 = vmul.f32 %v181, 0.6931472
    %v183 = vsub.f32 %v155, %v182
    %s184 = scalar_lea.vmem [#allocation7], 32
    %v185 = vld [vmem:[%s184] sm:$0xf]
    %v186 = vld [vmem:[%s184 + $0x4] sm:$0xf]
    %v187 = vld [vmem:[%s184 + $0x8] sm:$0xf]
    %v188 = vld [vmem:[%s184 + $0xc] sm:$0xf]
    %v189 = vunpack.c.l.bf16 %v185
    %v190 = vunpack.c.l.bf16 %v186
    %v191 = vunpack.c.l.bf16 %v187
    %v192 = vunpack.c.l.bf16 %v188
    %v193 = vmul.f32 %v189, %v99
    %v194 = vmul.f32 %v190, %v100
    %v195 = vmul.f32 %v191, %v101
    %v196 = vmul.f32 %v192, %v102
    %v197 = vadd.f32 %v193, %v194
    %v198 = vadd.f32 %v197, %v195
    %v199 = vadd.f32 %v198, %v196
    %v200 = vrot.slane %v199, 4
    %v201 = vadd.f32 %v199, %v200
    %v202 = vrot.slane %v201, 2
    %v203 = vadd.f32 %v201, %v202
    %v204 = vrot.slane %v203, 1
    %v205 = vadd.f32 %v203, %v204
    %v206 = vmax.f32 %v205, 0.0001
    %v207 = vmin.f32 %v206, 0.9999
    %v208 = vsub.f32 1.0, %v207
    %v209 = vlog2.pop %v208
    %v210 = vmul.f32 %v209, 0.6931472
    %v211 = vsub.f32 %v183, %v210
    %s212 = scalar_lea.vmem [#allocation7], 48
    %v213 = vld [vmem:[%s212] sm:$0xf]
    %v214 = vld [vmem:[%s212 + $0x4] sm:$0xf]
    %v215 = vld [vmem:[%s212 + $0x8] sm:$0xf]
    %v216 = vld [vmem:[%s212 + $0xc] sm:$0xf]
    %v217 = vunpack.c.l.bf16 %v213
    %v218 = vunpack.c.l.bf16 %v214
    %v219 = vunpack.c.l.bf16 %v215
    %v220 = vunpack.c.l.bf16 %v216
    %v221 = vmul.f32 %v217, %v99
    %v222 = vmul.f32 %v218, %v100
    %v223 = vmul.f32 %v219, %v101
    %v224 = vmul.f32 %v220, %v102
    %v225 = vadd.f32 %v221, %v222
    %v226 = vadd.f32 %v225, %v223
    %v227 = vadd.f32 %v226, %v224
    %v228 = vrot.slane %v227, 4
    %v229 = vadd.f32 %v227, %v228
    %v230 = vrot.slane %v229, 2
    %v231 = vadd.f32 %v229, %v230
    %v232 = vrot.slane %v231, 1
    %v233 = vadd.f32 %v231, %v232
    %v234 = vmax.f32 %v233, 0.0001
    %v235 = vmin.f32 %v234, 0.9999
    %v236 = vsub.f32 1.0, %v235
    %v237 = vlog2.pop %v236
    %v238 = vmul.f32 %v237, 0.6931472
    %v239 = vsub.f32 %v211, %v238
    %s240 = scalar_lea.vmem [#allocation7], 64
    %v241 = vld [vmem:[%s240] sm:$0xf]
    %v242 = vld [vmem:[%s240 + $0x4] sm:$0xf]
    %v243 = vld [vmem:[%s240 + $0x8] sm:$0xf]
    %v244 = vld [vmem:[%s240 + $0xc] sm:$0xf]
    %v245 = vunpack.c.l.bf16 %v241
    %v246 = vunpack.c.l.bf16 %v242
    %v247 = vunpack.c.l.bf16 %v243
    %v248 = vunpack.c.l.bf16 %v244
    %v249 = vmul.f32 %v245, %v99
    %v250 = vmul.f32 %v246, %v100
    %v251 = vmul.f32 %v247, %v101
    %v252 = vmul.f32 %v248, %v102
    %v253 = vadd.f32 %v249, %v250
    %v254 = vadd.f32 %v253, %v251
    %v255 = vadd.f32 %v254, %v252
    %v256 = vrot.slane %v255, 4
    %v257 = vadd.f32 %v255, %v256
    %v258 = vrot.slane %v257, 2
    %v259 = vadd.f32 %v257, %v258
    %v260 = vrot.slane %v259, 1
    %v261 = vadd.f32 %v259, %v260
    %v262 = vmax.f32 %v261, 0.0001
    %v263 = vmin.f32 %v262, 0.9999
    %v264 = vsub.f32 1.0, %v263
    %v265 = vlog2.pop %v264
    %v266 = vmul.f32 %v265, 0.6931472
    %v267 = vsub.f32 %v239, %v266
    %268 = vst [vmem:[#allocation11] sm:$0x1] %v267
    %v269 = vld [vmem:[%s3] sm:$0xf]
    %v270 = vld [vmem:[%s3 + $0x4] sm:$0xf]
    %v271 = vunpack.c.l.bf16 %v269
    %v272 = vunpack.c.l.bf16 %v270
    %v273 = vld [vmem:[#allocation8] sm:$0xf]
    %v274 = vld [vmem:[#allocation8 + $0x4] sm:$0xf]
    %v275 = vunpack.c.l.bf16 %v273
    %v276 = vunpack.c.l.bf16 %v274
    %v277 = vmul.f32 %v271, %v275
    %v278 = vmul.f32 %v272, %v276
    %v279 = vadd.f32 %v277, %v278
    %v280 = vrot.slane %v279, 4
    %v281 = vadd.f32 %v279, %v280
    %v282 = vrot.slane %v281, 2
    %v283 = vadd.f32 %v281, %v282
    %v284 = vrot.slane %v283, 1
    %v285 = vadd.f32 %v283, %v284
    %v286 = vmax.f32 %v285, 0.0001
    %v287 = vmin.f32 %v286, 0.9999
    %v288 = vlog2.pop %v287
    %v289 = vmul.f32 %v288, 0.6931472
    %v290 = vsub.f32 0.0, %v289
    %v291 = vld [vmem:[#allocation10] sm:$0xf]
    %v292 = vld [vmem:[#allocation10 + $0x4] sm:$0xf]
    %v293 = vunpack.c.l.bf16 %v291
    %v294 = vunpack.c.l.bf16 %v292
    %v295 = vmul.f32 %v293, %v271
    %v296 = vmul.f32 %v294, %v272
    %v297 = vadd.f32 %v295, %v296
    %v298 = vrot.slane %v297, 4
    %v299 = vadd.f32 %v297, %v298
    %v300 = vrot.slane %v299, 2
    %v301 = vadd.f32 %v299, %v300
    %v302 = vrot.slane %v301, 1
    %v303 = vadd.f32 %v301, %v302
    %v304 = vmax.f32 %v303, 0.0001
    %v305 = vmin.f32 %v304, 0.9999
    %v306 = vsub.f32 1.0, %v305
    %v307 = vlog2.pop %v306
    %v308 = vmul.f32 %v307, 0.6931472
    %v309 = vsub.f32 %v290, %v308
    %s310 = scalar_lea.vmem [#allocation10], 8
    %v311 = vld [vmem:[%s310] sm:$0xf]
    %v312 = vld [vmem:[%s310 + $0x4] sm:$0xf]
    %v313 = vunpack.c.l.bf16 %v311
    %v314 = vunpack.c.l.bf16 %v312
    %v315 = vmul.f32 %v313, %v271
    %v316 = vmul.f32 %v314, %v272
    %v317 = vadd.f32 %v315, %v316
    %v318 = vrot.slane %v317, 4
    %v319 = vadd.f32 %v317, %v318
    %v320 = vrot.slane %v319, 2
    %v321 = vadd.f32 %v319, %v320
    %v322 = vrot.slane %v321, 1
    %v323 = vadd.f32 %v321, %v322
    %v324 = vmax.f32 %v323, 0.0001
    %v325 = vmin.f32 %v324, 0.9999
    %v326 = vsub.f32 1.0, %v325
    %v327 = vlog2.pop %v326
    %v328 = vmul.f32 %v327, 0.6931472
    %v329 = vsub.f32 %v309, %v328
    %s330 = scalar_lea.vmem [#allocation10], 16
    %v331 = vld [vmem:[%s330] sm:$0xf]
    %v332 = vld [vmem:[%s330 + $0x4] sm:$0xf]
    %v333 = vunpack.c.l.bf16 %v331
    %v334 = vunpack.c.l.bf16 %v332
    %v335 = vmul.f32 %v333, %v271
    %v336 = vmul.f32 %v334, %v272
    %v337 = vadd.f32 %v335, %v336
    %v338 = vrot.slane %v337, 4
    %v339 = vadd.f32 %v337, %v338
    %v340 = vrot.slane %v339, 2
    %v341 = vadd.f32 %v339, %v340
    %v342 = vrot.slane %v341, 1
    %v343 = vadd.f32 %v341, %v342
    %v344 = vmax.f32 %v343, 0.0001
    %v345 = vmin.f32 %v344, 0.9999
    %v346 = vsub.f32 1.0, %v345
    %v347 = vlog2.pop %v346
    %v348 = vmul.f32 %v347, 0.6931472
    %v349 = vsub.f32 %v329, %v348
    %s350 = scalar_lea.vmem [#allocation10], 24
    %v351 = vld [vmem:[%s350] sm:$0xf]
    %v352 = vld [vmem:[%s350 + $0x4] sm:$0xf]
    %v353 = vunpack.c.l.bf16 %v351
    %v354 = vunpack.c.l.bf16 %v352
    %v355 = vmul.f32 %v353, %v271
    %v356 = vmul.f32 %v354, %v272
    %v357 = vadd.f32 %v355, %v356
    %v358 = vrot.slane %v357, 4
    %v359 = vadd.f32 %v357, %v358
    %v360 = vrot.slane %v359, 2
    %v361 = vadd.f32 %v359, %v360
    %v362 = vrot.slane %v361, 1
    %v363 = vadd.f32 %v361, %v362
    %v364 = vmax.f32 %v363, 0.0001
    %v365 = vmin.f32 %v364, 0.9999
    %v366 = vsub.f32 1.0, %v365
    %v367 = vlog2.pop %v366
    %v368 = vmul.f32 %v367, 0.6931472
    %v369 = vsub.f32 %v349, %v368
    %370 = vst [vmem:[#allocation12] sm:$0x1] %v369
    // Predicated region
    $region46: #{tpu_custom_call.1} parent=1 // pred_check
      _
    $region47: #{tpu_custom_call.1} parent=1 // pred_check_branch
      %372 = sbr.rel (0) target = $region49
    $region48: #{tpu_custom_call.1} parent=1 // pred_region
      %s374 = ssub.s32 16, 16
      %375 = vsyncadd [#allocation4], %s374
      %s377 = sshll.u32 [#allocation11], 4
      %s378 = int_to_ptr.vmem [resolvable:$true] %s377
      %380 = dma.vmem_to_hbm [thread:$0]  %s378, 16, %s6, [#allocation4]
    $region49: #{tpu_custom_call.1} parent=1 // pred_fallthru
      _
    // Predicated region
    $region50: #{tpu_custom_call.1} parent=1 // pred_check
      _
    $region51: #{tpu_custom_call.1} parent=1 // pred_check_branch
      %382 = sbr.rel (0) target = $region53
    $region52: #{tpu_custom_call.1} parent=1 // pred_region
      %s384 = ssub.s32 16, 16
      %385 = vsyncadd [#allocation13], %s384
      %s387 = sshll.u32 [#allocation12], 4
      %s388 = int_to_ptr.vmem [resolvable:$true] %s387
      %390 = dma.vmem_to_hbm [thread:$0]  %s388, 16, %s7, [#allocation13]
    $region53: #{tpu_custom_call.1} parent=1 // pred_fallthru
      _
    // Predicated region
    $region54: #{tpu_custom_call.1} parent=1 // pred_check
      _
    $region55: #{tpu_custom_call.1} parent=1 // pred_check_branch
      %392 = sbr.rel (0) target = $region57
    $region56: #{tpu_custom_call.1} parent=1 // pred_region
      %393 = dma.done [#allocation4], 16
    $region57: #{tpu_custom_call.1} parent=1 // pred_fallthru
      _
    // Predicated region
    $region58: #{tpu_custom_call.1} parent=1 // pred_check
      _
    $region59: #{tpu_custom_call.1} parent=1 // pred_check_branch
      %395 = sbr.rel (0) target = $region61
    $region60: #{tpu_custom_call.1} parent=1 // pred_region
      %396 = dma.done [#allocation13], 16
    $region61: #{tpu_custom_call.1} parent=1 // pred_fallthru
      _
    %397 = vsyncpa [#allocation3], 1
    %398 = vsyncpa [#allocation6], 1
    %399 = vsyncpa [#allocation9], 1
    %400 = vsyncpa [#allocation4], 1
    %401 = vsyncpa [#allocation13], 1

</llo_original>
